<compile_context>
chip_gen: v5e
topology: v5e:2x2
jax: 0.10.0
libtpu: 0.0.40
codegen_flags: <defaults>
</compile_context>

<pallas_src>
import jax
import jax.numpy as jnp
from jax.experimental import pallas as pl
from jax.experimental.pallas import tpu as pltpu

FEAT = 100            # logical feature width of every Linear(100, 100)
PAD = 128             # lane-dense padded width
MAX_BLOCK_ROWS = 1024  # batch tile upper bound (multiple of 8)


def _cdiv(a, b):
    return -(-a // b)


def _round_up(n, m):
    return ((n + m - 1) // m) * m


def unit_module_kernel(x_ref, w_ref, b_ref, o_ref, xpad_ref):
    """x_ref: (tb,100) streamed batch tile. w_ref: (3,128,128) packed W1/W2/W3
    (in,out layout, zero-padded). b_ref: (3,1,128) packed biases.
    o_ref: (tb,128). xpad_ref: (tb,128) VMEM scratch for lane-padding x."""
    tb = x_ref.shape[0]

    # Lane-pad x 100 -> 128 in VMEM so all three matmuls see lane-dense
    # 128-wide MXU operands.  Zeroing + copy is VMEM-only (negligible vs. the
    # matmuls) and done every step so it is safe under megacore sharding.
    xpad_ref[...] = jnp.zeros((tb, PAD), x_ref.dtype)
    xpad_ref[:, :FEAT] = x_ref[...]
    x = xpad_ref[...]

    # l1: x @ W1 + b1
    h = jnp.dot(x, w_ref[0], preferred_element_type=jnp.float32) + b_ref[0]
    # seq: ReLU -> Linear -> ReLU
    h = jnp.maximum(h, 0.0)
    h = jnp.dot(h, w_ref[1], preferred_element_type=jnp.float32) + b_ref[1]
    h = jnp.maximum(h, 0.0)
    # l2
    h = jnp.dot(h, w_ref[2], preferred_element_type=jnp.float32) + b_ref[2]
    o_ref[...] = h.astype(o_ref.dtype)


def unit_module_forward(x, w1, b1, w2, b2, w3, b3):
    """x: (B, 100) f32. w*: (in, out) f32 (transpose of PyTorch layout).
    b*: (out,) f32. Returns (B, 100) f32."""
    B, in_dim = x.shape
    assert in_dim == FEAT

    # --- Zero-pad weights/biases to 128 lanes.  Padded lanes stay exactly
    #     zero through every layer (zero weight rows/cols, zero bias lanes,
    #     ReLU(0)=0), so valid lanes are bit-identical to the unpadded math.
    def pad_w(w):
        return jnp.zeros((PAD, PAD), w.dtype).at[: w.shape[0], : w.shape[1]].set(w)

    def pad_b(b):
        return jnp.zeros((1, PAD), b.dtype).at[0, : b.shape[0]].set(b)

    w_packed = jnp.stack([pad_w(w1), pad_w(w2), pad_w(w3)])   # (3,128,128)
    b_packed = jnp.stack([pad_b(b1), pad_b(b2), pad_b(b3)])   # (3,1,128)

    # --- Batch tiling: choose tile COUNT first, then the tile size, so the
    #     last (ragged) block wastes < 8 rows instead of up to ~tb rows.
    #     Force >= 2 tiles for B > 16 so v7x can shard the "parallel" axis
    #     across both TensorCores.
    n_tiles = _cdiv(B, MAX_BLOCK_ROWS)
    if B > 16:
        n_tiles = max(n_tiles, 2)
    tb = _round_up(_cdiv(B, n_tiles), 8)
    grid = (_cdiv(B, tb),)

    out_padded = pl.pallas_call(
        unit_module_kernel,
        out_shape=jax.ShapeDtypeStruct((B, PAD), x.dtype),
        grid=grid,
        in_specs=[
            # x streamed per step, no HBM-side padding (ragged last block is
            # masked by Pallas; garbage rows are row-independent and dropped).
            pl.BlockSpec((tb, FEAT), lambda i: (i, 0)),
            pl.BlockSpec((3, PAD, PAD), lambda i: (0, 0, 0)),   # weights resident
            pl.BlockSpec((3, 1, PAD), lambda i: (0, 0, 0)),     # biases resident
        ],
        out_specs=pl.BlockSpec((tb, PAD), lambda i: (i, 0)),
        scratch_shapes=[pltpu.VMEM((tb, PAD), jnp.float32)],
        compiler_params=pltpu.CompilerParams(
            dimension_semantics=("parallel",),
        ),
    )(x, w_packed, b_packed)

    # Lane trim back to the logical 100 features.  Consumers that accept a
    # 128-wide (zero-padded) output can use `out_padded` directly and save
    # this extra HBM pass.
    return out_padded[:, :FEAT]


def init_params(key):
    """Deterministic init mimicking nn.Linear default (uniform +/- 1/sqrt(fan_in)).
    Weights are returned as (in, out), i.e. the transpose of PyTorch's (out, in)."""
    ks = jax.random.split(key, 6)
    bound = 1.0 / jnp.sqrt(jnp.float32(FEAT))
    w1 = jax.random.uniform(ks[0], (FEAT, FEAT), jnp.float32, -bound, bound)
    b1 = jax.random.uniform(ks[1], (FEAT,), jnp.float32, -bound, bound)
    w2 = jax.random.uniform(ks[2], (FEAT, FEAT), jnp.float32, -bound, bound)
    b2 = jax.random.uniform(ks[3], (FEAT,), jnp.float32, -bound, bound)
    w3 = jax.random.uniform(ks[4], (FEAT, FEAT), jnp.float32, -bound, bound)
    b3 = jax.random.uniform(ks[5], (FEAT,), jnp.float32, -bound, bound)
    return w1, b1, w2, b2, w3, b3


if __name__ == "__main__":
    key = jax.random.PRNGKey(0)
    k_x, k_x2, k_p = jax.random.split(key, 3)

    w1, b1, w2, b2, w3, b3 = init_params(k_p)

    def ref(x):
        h = jnp.maximum(x @ w1 + b1, 0.0)
        h = jnp.maximum(h @ w2 + b2, 0.0)
        return h @ w3 + b3

    # Small batch (single grid step, tb == 8).
    x_small = jax.random.normal(k_x, (8, FEAT), jnp.float32)
    out_small = jax.block_until_ready(
        unit_module_forward(x_small, w1, b1, w2, b2, w3, b3))
    assert out_small.shape == (8, FEAT)
    assert jnp.allclose(out_small, ref(x_small), atol=1e-4, rtol=1e-4), \
        "small-batch mismatch vs reference"

    # Larger, non-tile-aligned batch (exercises multi-step grid + ragged last block).
    x_big = jax.random.normal(k_x2, (520, FEAT), jnp.float32)
    out_big = jax.block_until_ready(
        unit_module_forward(x_big, w1, b1, w2, b2, w3, b3))
    assert out_big.shape == (520, FEAT)
    assert jnp.allclose(out_big, ref(x_big), atol=1e-4, rtol=1e-4), \
        "large-batch mismatch vs reference"

    print("KERNEL_OK")
</pallas_src>

<mosaic_0001>
module attributes {stable_mosaic.version = 11 : i64} {
  func.func @unit_module_kernel(%arg0: i32, %arg1: memref<8x100xf32, #tpu.memory_space<vmem>>, %arg2: memref<3x128x128xf32, #tpu.memory_space<vmem>>, %arg3: memref<3x1x128xf32, #tpu.memory_space<vmem>>, %arg4: memref<8x128xf32, #tpu.memory_space<vmem>>, %arg5: memref<8x128xf32, #tpu.memory_space<vmem>>) attributes {dimension_semantics = [#tpu.dimension_semantics<parallel>], iteration_bounds = array<i64: 1>, scalar_prefetch = 0 : i64, scratch_operands = 1 : i64, tpu.core_type = #tpu.core_type<tc>, window_params = [{transform_indices = @transform_0, window_bounds = array<i64: 8, 100>}, {pipeline_mode = #tpu.pipeline_mode<synchronous>, transform_indices = @transform_1, window_bounds = array<i64: 3, 128, 128>}, {pipeline_mode = #tpu.pipeline_mode<synchronous>, transform_indices = @transform_2, window_bounds = array<i64: 3, 1, 128>}, {transform_indices = @transform_3, window_bounds = array<i64: 8, 128>}]} {
    %cst = arith.constant 0.000000e+00 : f32
    %0 = vector.broadcast %cst : f32 to vector<8x128xf32>
    %c0 = arith.constant 0 : index
    %c0_0 = arith.constant 0 : index
    %1 = vector.load %arg5[%c0, %c0_0] : memref<8x128xf32, #tpu.memory_space<vmem>>, vector<8x128xf32>
    tpu.vector_store %arg5[%c0, %c0_0], %0 {strides = array<i32>} : memref<8x128xf32, #tpu.memory_space<vmem>>, vector<8x128xf32>,
    %c0_1 = arith.constant 0 : index
    %c0_2 = arith.constant 0 : index
    %2 = vector.load %arg1[%c0_1, %c0_2] : memref<8x100xf32, #tpu.memory_space<vmem>>, vector<8x100xf32>
    %c0_3 = arith.constant 0 : index
    %c0_4 = arith.constant 0 : index
    %3 = vector.load %arg5[%c0_3, %c0_4] : memref<8x128xf32, #tpu.memory_space<vmem>>, vector<8x100xf32>
    tpu.vector_store %arg5[%c0_3, %c0_4], %2 {strides = array<i32>} : memref<8x128xf32, #tpu.memory_space<vmem>>, vector<8x100xf32>,
    %c0_5 = arith.constant 0 : index
    %c0_6 = arith.constant 0 : index
    %4 = vector.load %arg5[%c0_5, %c0_6] : memref<8x128xf32, #tpu.memory_space<vmem>>, vector<8x128xf32>
    %c0_7 = arith.constant 0 : index
    %c0_8 = arith.constant 0 : index
    %c0_9 = arith.constant 0 : index
    %5 = vector.load %arg2[%c0_7, %c0_8, %c0_9] : memref<3x128x128xf32, #tpu.memory_space<vmem>>, vector<1x128x128xf32>
    %6 = vector.shape_cast %5 : vector<1x128x128xf32> to vector<128x128xf32>
    %cst_10 = arith.constant dense<0.000000e+00> : vector<8x128xf32>
    %7 = tpu.matmul %4, %6, %cst_10 {dimension_numbers = #tpu.dot_dimension_numbers<[1], [0], [0], [1], [0, 0, 1, 1], [], []>} : vector<8x128xf32>, vector<128x128xf32>, vector<8x128xf32> -> vector<8x128xf32>
    %c0_11 = arith.constant 0 : index
    %c0_12 = arith.constant 0 : index
    %c0_13 = arith.constant 0 : index
    %8 = vector.load %arg3[%c0_11, %c0_12, %c0_13] : memref<3x1x128xf32, #tpu.memory_space<vmem>>, vector<1x1x128xf32>
    %9 = vector.shape_cast %8 : vector<1x1x128xf32> to vector<1x128xf32>
    %10 = vector.broadcast %9 : vector<1x128xf32> to vector<8x128xf32>
    %11 = arith.addf %7, %10 : vector<8x128xf32>
    %cst_14 = arith.constant 0.000000e+00 : f32
    %12 = vector.broadcast %cst_14 : f32 to vector<8x128xf32>
    %13 = arith.maximumf %11, %12 : vector<8x128xf32>
    %c1 = arith.constant 1 : index
    %c0_15 = arith.constant 0 : index
    %c0_16 = arith.constant 0 : index
    %14 = vector.load %arg2[%c1, %c0_15, %c0_16] : memref<3x128x128xf32, #tpu.memory_space<vmem>>, vector<1x128x128xf32>
    %15 = vector.shape_cast %14 : vector<1x128x128xf32> to vector<128x128xf32>
    %cst_17 = arith.constant dense<0.000000e+00> : vector<8x128xf32>
    %16 = tpu.matmul %13, %15, %cst_17 {dimension_numbers = #tpu.dot_dimension_numbers<[1], [0], [0], [1], [0, 0, 1, 1], [], []>} : vector<8x128xf32>, vector<128x128xf32>, vector<8x128xf32> -> vector<8x128xf32>
    %c1_18 = arith.constant 1 : index
    %c0_19 = arith.constant 0 : index
    %c0_20 = arith.constant 0 : index
    %17 = vector.load %arg3[%c1_18, %c0_19, %c0_20] : memref<3x1x128xf32, #tpu.memory_space<vmem>>, vector<1x1x128xf32>
    %18 = vector.shape_cast %17 : vector<1x1x128xf32> to vector<1x128xf32>
    %19 = vector.broadcast %18 : vector<1x128xf32> to vector<8x128xf32>
    %20 = arith.addf %16, %19 : vector<8x128xf32>
    %cst_21 = arith.constant 0.000000e+00 : f32
    %21 = vector.broadcast %cst_21 : f32 to vector<8x128xf32>
    %22 = arith.maximumf %20, %21 : vector<8x128xf32>
    %c2 = arith.constant 2 : index
    %c0_22 = arith.constant 0 : index
    %c0_23 = arith.constant 0 : index
    %23 = vector.load %arg2[%c2, %c0_22, %c0_23] : memref<3x128x128xf32, #tpu.memory_space<vmem>>, vector<1x128x128xf32>
    %24 = vector.shape_cast %23 : vector<1x128x128xf32> to vector<128x128xf32>
    %cst_24 = arith.constant dense<0.000000e+00> : vector<8x128xf32>
    %25 = tpu.matmul %22, %24, %cst_24 {dimension_numbers = #tpu.dot_dimension_numbers<[1], [0], [0], [1], [0, 0, 1, 1], [], []>} : vector<8x128xf32>, vector<128x128xf32>, vector<8x128xf32> -> vector<8x128xf32>
    %c2_25 = arith.constant 2 : index
    %c0_26 = arith.constant 0 : index
    %c0_27 = arith.constant 0 : index
    %26 = vector.load %arg3[%c2_25, %c0_26, %c0_27] : memref<3x1x128xf32, #tpu.memory_space<vmem>>, vector<1x1x128xf32>
    %27 = vector.shape_cast %26 : vector<1x1x128xf32> to vector<1x128xf32>
    %28 = vector.broadcast %27 : vector<1x128xf32> to vector<8x128xf32>
    %29 = arith.addf %25, %28 : vector<8x128xf32>
    %c0_28 = arith.constant 0 : index
    %c0_29 = arith.constant 0 : index
    %30 = vector.load %arg4[%c0_28, %c0_29] : memref<8x128xf32, #tpu.memory_space<vmem>>, vector<8x128xf32>
    tpu.vector_store %arg4[%c0_28, %c0_29], %29 {strides = array<i32>} : memref<8x128xf32, #tpu.memory_space<vmem>>, vector<8x128xf32>,
    return
  }
  func.func @transform_0(%arg0: i32) -> (i32, i32) {
    %c0_i32 = arith.constant 0 : i32
    %c0_i32_0 = arith.constant 0 : i32
    return %arg0, %c0_i32 : i32, i32
  }
  func.func @transform_1(%arg0: i32) -> (i32, i32, i32) {
    %c0_i32 = arith.constant 0 : i32
    %c0_i32_0 = arith.constant 0 : i32
    %c0_i32_1 = arith.constant 0 : i32
    %c0_i32_2 = arith.constant 0 : i32
    return %c0_i32, %c0_i32_0, %c0_i32_1 : i32, i32, i32
  }
  func.func @transform_2(%arg0: i32) -> (i32, i32, i32) {
    %c0_i32 = arith.constant 0 : i32
    %c0_i32_0 = arith.constant 0 : i32
    %c0_i32_1 = arith.constant 0 : i32
    %c0_i32_2 = arith.constant 0 : i32
    return %c0_i32, %c0_i32_0, %c0_i32_1 : i32, i32, i32
  }
  func.func @transform_3(%arg0: i32) -> (i32, i32) {
    %c0_i32 = arith.constant 0 : i32
    %c0_i32_0 = arith.constant 0 : i32
    return %arg0, %c0_i32 : i32, i32
  }
}

</mosaic_0001>

<llo_original>
// kernel: tpu_custom_call.1
$region0: #{tpu_custom_call.1}
  #allocation0 [shape = 'u32[]', space=smem, size = 0x4, offset = 0x4, fixed_abs, tag = 'smem constant byte address 0x4 - core index']
  #allocation1 [shape = 'u32[72,128]{1,0:T(1,128)}', space=vmem, size = 0x9000, scoped, tag = 'internal scratch']
  #allocation2 [shape = 'f32[8,128]{1,0:T(8,128)}', space=vmem, size = 0x1000, scoped, tag = 'scratch operand']
  %s0 = inlined_call_operand.hbm [shape: f32[8,100], index: 0, kind: input, shape index: {}]
  %s1 = inlined_call_operand.hbm [shape: f32[3,128,128], index: 1, kind: input, shape index: {}]
  %s2 = inlined_call_operand.hbm [shape: f32[3,1,128], index: 2, kind: input, shape index: {}]
  %s3 = inlined_call_operand.hbm [shape: f32[8,128], index: 3, kind: output, shape index: {}]
  %s4 = sld [smem:[#allocation0]]
  $region34: #{tpu_custom_call.1} parent=0
    _
  %s6 = ssub.s32 1, %s4
  %s7 = scalar_select 0, %s6, %s4
  $region1: #{tpu_custom_call.1} parent=0
    #allocation3 [shape = 'u8[4096]{0}', space=vmem, size = 0x1000, scoped, tag = 'input window, operand 0, single buffered']
    #allocation4 [shape = 's32[1]{0}', space=sflag, size = 0x4, scoped, tag = 'scoped memory for tpu_custom_call.1']
    #allocation5 [shape = 's32[1]{0}', space=sflag, size = 0x4, scoped, tag = 'scoped memory for tpu_custom_call.1']
    #allocation6 [shape = 'u8[196608]{0}', space=vmem, size = 0x30000, scoped, tag = 'input window, operand 1, single buffered']
    #allocation7 [shape = 's32[1]{0}', space=sflag, size = 0x4, scoped, tag = 'scoped memory for tpu_custom_call.1']
    #allocation8 [shape = 'u8[1536]{0}', space=vmem, size = 0x800, scoped, tag = 'input window, operand 2, single buffered']
    #allocation9 [shape = 'u8[4096]{0}', space=vmem, size = 0x1000, scoped, tag = 'output window, operand 0, single buffered']
    %8 = vsyncpa [#allocation4], 0
    %9 = vsyncpa [#allocation7], 0
    %10 = vsyncpa [#allocation5], 0
    // Predicated region
    $region2: #{tpu_custom_call.1} parent=1 // pred_check
      _
    $region3: #{tpu_custom_call.1} parent=1 // pred_check_branch
      %12 = sbr.rel (0) target = $region5
    $region4: #{tpu_custom_call.1} parent=1 // pred_region
      %14 = vsyncadd [#allocation4], 0
      %s16 = sshll.u32 %s0, 4
      %s17 = int_to_ptr.hbm [resolvable:$true] %s16
      %s18 = sshll.u32 [#allocation3], 4
      %s19 = int_to_ptr.vmem [resolvable:$true] %s18
      %21 = dma.hbm_to_vmem [thread:$0]  %s17, 128, %s19, [#allocation4]
    $region5: #{tpu_custom_call.1} parent=1 // pred_fallthru
      _
    // Predicated region
    $region6: #{tpu_custom_call.1} parent=1 // pred_check
      _
    $region7: #{tpu_custom_call.1} parent=1 // pred_check_branch
      %23 = sbr.rel (0) target = $region9
    $region8: #{tpu_custom_call.1} parent=1 // pred_region
      %25 = vsyncadd [#allocation7], 0
      %s26 = sshll.u32 %s1, 4
      %s27 = int_to_ptr.hbm [resolvable:$true] %s26
      %s28 = sshll.u32 [#allocation6], 4
      %s29 = int_to_ptr.vmem [resolvable:$true] %s28
      %34 = dma.hbm_to_vmem [thread:$0]  %s27, 6144, %s29, [#allocation7], 128, 128, 8
    $region9: #{tpu_custom_call.1} parent=1 // pred_fallthru
      _
    // Predicated region
    $region10: #{tpu_custom_call.1} parent=1 // pred_check
      _
    $region11: #{tpu_custom_call.1} parent=1 // pred_check_branch
      %36 = sbr.rel (0) target = $region13
    $region12: #{tpu_custom_call.1} parent=1 // pred_region
      %38 = vsyncadd [#allocation7], 0
      %s39 = sshll.u32 %s2, 4
      %s40 = int_to_ptr.hbm [resolvable:$true] %s39
      %s41 = sshll.u32 [#allocation8], 4
      %s42 = int_to_ptr.vmem [resolvable:$true] %s41
      %47 = dma.hbm_to_vmem [thread:$0]  %s40, 48, %s42, [#allocation7], 16, 16, 1
    $region13: #{tpu_custom_call.1} parent=1 // pred_fallthru
      _
    // Predicated region
    $region14: #{tpu_custom_call.1} parent=1 // pred_check
      _
    $region15: #{tpu_custom_call.1} parent=1 // pred_check_branch
      %49 = sbr.rel (0) target = $region17
    $region16: #{tpu_custom_call.1} parent=1 // pred_region
      %51 = dma.done [#allocation4], 128
    $region17: #{tpu_custom_call.1} parent=1 // pred_fallthru
      _
    // Predicated region
    $region18: #{tpu_custom_call.1} parent=1 // pred_check
      _
    $region19: #{tpu_custom_call.1} parent=1 // pred_check_branch
      %53 = sbr.rel (0) target = $region21
    $region20: #{tpu_custom_call.1} parent=1 // pred_region
      %55 = dma.done [#allocation7], 6144
    $region21: #{tpu_custom_call.1} parent=1 // pred_fallthru
      _
    // Predicated region
    $region22: #{tpu_custom_call.1} parent=1 // pred_check
      _
    $region23: #{tpu_custom_call.1} parent=1 // pred_check_branch
      %57 = sbr.rel (0) target = $region25
    $region24: #{tpu_custom_call.1} parent=1 // pred_region
      %59 = dma.done [#allocation7], 48
    $region25: #{tpu_custom_call.1} parent=1 // pred_fallthru
      _
    %60 = vst [vmem:[#allocation2] sm:$0xff] 0.0
    %v61 = vld [vmem:[#allocation3] sm:$0xff]
    %vm62 = vcmask 818176
    %63 = vst.msk [vmem:[#allocation2] sm:$0xff] %vm62, %v61
    %v64 = vld [vmem:[#allocation2] sm:$0xff]
    %v65 = vld [vmem:[#allocation6] sm:$0xff]
    %v66 = vld [vmem:[#allocation6 + $0x8] sm:$0xff]
    %v67 = vld [vmem:[#allocation6 + $0x10] sm:$0xff]
    %v68 = vld [vmem:[#allocation6 + $0x18] sm:$0xff]
    %v69 = vld [vmem:[#allocation6 + $0x20] sm:$0xff]
    %v70 = vld [vmem:[#allocation6 + $0x28] sm:$0xff]
    %v71 = vld [vmem:[#allocation6 + $0x30] sm:$0xff]
    %v72 = vld [vmem:[#allocation6 + $0x38] sm:$0xff]
    %v73 = vld [vmem:[#allocation6 + $0x40] sm:$0xff]
    %v74 = vld [vmem:[#allocation6 + $0x48] sm:$0xff]
    %v75 = vld [vmem:[#allocation6 + $0x50] sm:$0xff]
    %v76 = vld [vmem:[#allocation6 + $0x58] sm:$0xff]
    %v77 = vld [vmem:[#allocation6 + $0x60] sm:$0xff]
    %v78 = vld [vmem:[#allocation6 + $0x68] sm:$0xff]
    %v79 = vld [vmem:[#allocation6 + $0x70] sm:$0xff]
    %v80 = vld [vmem:[#allocation6 + $0x78] sm:$0xff]
    %v81 = vld [vmem:[#allocation8] sm:$0x1]
    %v83 = vperm.slane %v81, 0
    %85 = vmatpush.msra.mxu0 %v80
    %86 = vmatpush.msra.mxu0 %v79
    %87 = vmatpush.msra.mxu0 %v78
    %88 = vmatpush.msra.mxu0 %v77
    %89 = vmatpush.msra.mxu0 %v76
    %90 = vmatpush.msra.mxu0 %v75
    %91 = vmatpush.msra.mxu0 %v74
    %92 = vmatpush.msra.mxu0 %v73
    %93 = vmatpush.msra.mxu0 %v72
    %94 = vmatpush.msra.mxu0 %v71
    %95 = vmatpush.msra.mxu0 %v70
    %96 = vmatpush.msra.mxu0 %v69
    %97 = vmatpush.msra.mxu0 %v68
    %98 = vmatpush.msra.mxu0 %v67
    %99 = vmatpush.msra.mxu0 %v66
    %100 = vmatpush.msra.mxu0 %v65
    %101 = vmatmul.f32.gmra.mxu0 %v64
    %v102 = vpop.f32.mrf.mxu0
    %v103 = vadd.f32 %v83, %v102
    %104 = vdwg.mxu0
    %v105 = vmax.f32 %v103, 0.0
    %s106 = scalar_lea.vmem [#allocation6], 128
    %v107 = vld [vmem:[%s106] sm:$0xff]
    %v108 = vld [vmem:[%s106 + $0x8] sm:$0xff]
    %v109 = vld [vmem:[%s106 + $0x10] sm:$0xff]
    %v110 = vld [vmem:[%s106 + $0x18] sm:$0xff]
    %v111 = vld [vmem:[%s106 + $0x20] sm:$0xff]
    %v112 = vld [vmem:[%s106 + $0x28] sm:$0xff]
    %v113 = vld [vmem:[%s106 + $0x30] sm:$0xff]
    %v114 = vld [vmem:[%s106 + $0x38] sm:$0xff]
    %v115 = vld [vmem:[%s106 + $0x40] sm:$0xff]
    %v116 = vld [vmem:[%s106 + $0x48] sm:$0xff]
    %v117 = vld [vmem:[%s106 + $0x50] sm:$0xff]
    %v118 = vld [vmem:[%s106 + $0x58] sm:$0xff]
    %v119 = vld [vmem:[%s106 + $0x60] sm:$0xff]
    %v120 = vld [vmem:[%s106 + $0x68] sm:$0xff]
    %v121 = vld [vmem:[%s106 + $0x70] sm:$0xff]
    %v122 = vld [vmem:[%s106 + $0x78] sm:$0xff]
    %s123 = scalar_lea.vmem [#allocation8], 1
    %v124 = vld [vmem:[%s123] sm:$0x1]
    %v126 = vperm.slane %v124, 0
    %128 = vmatpush.msra.mxu0 %v122
    %129 = vmatpush.msra.mxu0 %v121
    %130 = vmatpush.msra.mxu0 %v120
    %131 = vmatpush.msra.mxu0 %v119
    %132 = vmatpush.msra.mxu0 %v118
    %133 = vmatpush.msra.mxu0 %v117
    %134 = vmatpush.msra.mxu0 %v116
    %135 = vmatpush.msra.mxu0 %v115
    %136 = vmatpush.msra.mxu0 %v114
    %137 = vmatpush.msra.mxu0 %v113
    %138 = vmatpush.msra.mxu0 %v112
    %139 = vmatpush.msra.mxu0 %v111
    %140 = vmatpush.msra.mxu0 %v110
    %141 = vmatpush.msra.mxu0 %v109
    %142 = vmatpush.msra.mxu0 %v108
    %143 = vmatpush.msra.mxu0 %v107
    %144 = vmatmul.f32.gmra.mxu0 %v105
    %v145 = vpop.f32.mrf.mxu0
    %v146 = vadd.f32 %v126, %v145
    %147 = vdwg.mxu0
    %v148 = vmax.f32 %v146, 0.0
    %s149 = scalar_lea.vmem [#allocation6], 256
    %v150 = vld [vmem:[%s149] sm:$0xff]
    %v151 = vld [vmem:[%s149 + $0x8] sm:$0xff]
    %v152 = vld [vmem:[%s149 + $0x10] sm:$0xff]
    %v153 = vld [vmem:[%s149 + $0x18] sm:$0xff]
    %v154 = vld [vmem:[%s149 + $0x20] sm:$0xff]
    %v155 = vld [vmem:[%s149 + $0x28] sm:$0xff]
    %v156 = vld [vmem:[%s149 + $0x30] sm:$0xff]
    %v157 = vld [vmem:[%s149 + $0x38] sm:$0xff]
    %v158 = vld [vmem:[%s149 + $0x40] sm:$0xff]
    %v159 = vld [vmem:[%s149 + $0x48] sm:$0xff]
    %v160 = vld [vmem:[%s149 + $0x50] sm:$0xff]
    %v161 = vld [vmem:[%s149 + $0x58] sm:$0xff]
    %v162 = vld [vmem:[%s149 + $0x60] sm:$0xff]
    %v163 = vld [vmem:[%s149 + $0x68] sm:$0xff]
    %v164 = vld [vmem:[%s149 + $0x70] sm:$0xff]
    %v165 = vld [vmem:[%s149 + $0x78] sm:$0xff]
    %s166 = scalar_lea.vmem [#allocation8], 2
    %v167 = vld [vmem:[%s166] sm:$0x1]
    %v169 = vperm.slane %v167, 0
    %171 = vmatpush.msra.mxu0 %v165
    %172 = vmatpush.msra.mxu0 %v164
    %173 = vmatpush.msra.mxu0 %v163
    %174 = vmatpush.msra.mxu0 %v162
    %175 = vmatpush.msra.mxu0 %v161
    %176 = vmatpush.msra.mxu0 %v160
    %177 = vmatpush.msra.mxu0 %v159
    %178 = vmatpush.msra.mxu0 %v158
    %179 = vmatpush.msra.mxu0 %v157
    %180 = vmatpush.msra.mxu0 %v156
    %181 = vmatpush.msra.mxu0 %v155
    %182 = vmatpush.msra.mxu0 %v154
    %183 = vmatpush.msra.mxu0 %v153
    %184 = vmatpush.msra.mxu0 %v152
    %185 = vmatpush.msra.mxu0 %v151
    %186 = vmatpush.msra.mxu0 %v150
    %187 = vmatmul.f32.gmra.mxu0 %v148
    %v188 = vpop.f32.mrf.mxu0
    %v189 = vadd.f32 %v169, %v188
    %190 = vdwg.mxu0
    %191 = vst [vmem:[#allocation9] sm:$0xff] %v189
    // Predicated region
    $region26: #{tpu_custom_call.1} parent=1 // pred_check
      _
    $region27: #{tpu_custom_call.1} parent=1 // pred_check_branch
      %193 = sbr.rel (0) target = $region29
    $region28: #{tpu_custom_call.1} parent=1 // pred_region
      %195 = vsyncadd [#allocation5], 0
      %s197 = sshll.u32 [#allocation9], 4
      %s198 = int_to_ptr.vmem [resolvable:$true] %s197
      %s199 = sshll.u32 %s3, 4
      %s200 = int_to_ptr.hbm [resolvable:$true] %s199
      %202 = dma.vmem_to_hbm [thread:$0]  %s198, 128, %s200, [#allocation5]
    $region29: #{tpu_custom_call.1} parent=1 // pred_fallthru
      _
    // Predicated region
    $region30: #{tpu_custom_call.1} parent=1 // pred_check
      _
    $region31: #{tpu_custom_call.1} parent=1 // pred_check_branch
      %204 = sbr.rel (0) target = $region33
    $region32: #{tpu_custom_call.1} parent=1 // pred_region
      %206 = dma.done [#allocation5], 128
    $region33: #{tpu_custom_call.1} parent=1 // pred_fallthru
      _
    %207 = vsyncpa [#allocation4], 1
    %208 = vsyncpa [#allocation7], 1
    %209 = vsyncpa [#allocation5], 1

</llo_original>
